<compile_context>
chip_gen: v5e
topology: v5e:2x2
jax: 0.10.0
libtpu: 0.0.40
codegen_flags: <defaults>
</compile_context>

<pallas_src>
import math

import jax
import jax.numpy as jnp
from jax.experimental import pallas as pl
from jax.experimental.pallas import tpu as pltpu


# lowbias32 hash constants, pre-wrapped into the signed int32 range so the
# int32 arithmetic inside the kernel wraps exactly like uint32 would.
_GOLDEN_I32 = 0x9E3779B9 - (1 << 32)   # -1640531527
_C1_I32 = 0x7FEB352D                   #  2145989933
_C2_I32 = 0x846CA68B - (1 << 32)       # -2073301365


def _lsr32(x, k: int):
    """Logical right shift of an int32 array (arith shift + mask of sign bits)."""
    return jnp.right_shift(x, k) & jnp.int32((1 << (32 - k)) - 1)


def _pick_tile_rows(rows: int, width: int, max_itemsize: int, n_embs: int) -> int:
    """Pick a row-tile size that keeps double-buffered in+out tiles in VMEM."""
    if rows <= 8:
        return rows
    # ~12 MiB of live (2*n tensors x 2 pipeline buffers) tile data fits even
    # v5e's 16 MiB default scoped VMEM and v7x's 64 MiB total; ~1 MiB per tile
    # per tensor is the measured sweet spot for HBM-roofline streaming.
    budget = 12 * 1024 * 1024
    per_tile = min(budget // (4 * n_embs), 1 * 1024 * 1024)
    tr = per_tile // max(1, width * max_itemsize)
    tr = max(8, (tr // 8) * 8)          # (8, 128) sublane alignment
    return min(tr, rows)


def _make_kernel(n_embs: int, keep: float, tile_rows: int, width: int):
    inv_keep = 1.0 / keep
    thr24 = int(round(keep * float(1 << 24)))   # keep-prob as 24-bit threshold

    def kernel(seed_ref, *refs):
        in_refs = refs[:n_embs]
        out_refs = refs[n_embs:]

        # Global element index of every element of this tile within the
        # flattened (rows, width) mask array.
        row0 = pl.program_id(0) * tile_rows
        row = jax.lax.broadcasted_iota(jnp.int32, (tile_rows, width), 0) + row0
        col = jax.lax.broadcasted_iota(jnp.int32, (tile_rows, width), 1)
        idx = row * jnp.int32(width) + col

        # lowbias32 avalanche hash of (seed, idx); int32 multiply/xor wrap
        # identically to uint32, shifts are made logical via _lsr32.
        x = idx ^ (seed_ref[0] * jnp.int32(_GOLDEN_I32))
        x = x ^ _lsr32(x, 16)
        x = x * jnp.int32(_C1_I32)
        x = x ^ _lsr32(x, 15)
        x = x * jnp.int32(_C2_I32)
        x = x ^ _lsr32(x, 16)

        # Bernoulli(keep): top 24 random bits vs keep * 2^24 (integer compare,
        # no float-uniform trick).
        keep_mask = _lsr32(x, 8) < jnp.int32(thr24)

        # One scale tensor per distinct dtype -> native-dtype multiply
        # (bf16 stays bf16 on v6e/v7x); the boolean pattern (the dropout
        # mask) is shared by every embedding, matching the PyTorch module.
        scales = {}
        for i_ref, o_ref in zip(in_refs, out_refs):
            dt = jnp.dtype(o_ref.dtype)
            if dt not in scales:
                scales[dt] = jnp.where(keep_mask,
                                       jnp.asarray(inv_keep, dtype=dt),
                                       jnp.asarray(0.0, dtype=dt))
            o_ref[...] = i_ref[...] * scales[dt]

    return kernel


def embeddings_dropout(embs, seed: int, p: float = 0.5, training: bool = True):
    """Pallas implementation of EmbeddingsDropout.forward(*embs)."""
    embs = tuple(embs)
    if p < 0.0 or p > 1.0:
        raise ValueError(
            f"dropout probability has to be between 0 and 1, but got {p}")
    if not embs:
        return ()
    shape = embs[0].shape
    for e in embs:
        if e.shape != shape:
            # TODO(synk): PyTorch broadcasts `emb * mask`; only identical shapes supported here.
            raise ValueError("all embeddings must share embs[0].shape")
    if (not training) or p == 0.0:
        return embs
    if p == 1.0:
        # TODO(synk): PyTorch yields NaN here (0/0); we return zeros instead.
        return tuple(jnp.zeros_like(e) for e in embs)

    n = len(embs)
    keep = 1.0 - p

    # Flatten to (rows, width); the hidden dim stays last so lanes are dense.
    if len(shape) == 0:
        rows, width = 1, 1
    else:
        width = int(shape[-1])
        rows = int(math.prod(shape[:-1])) if len(shape) > 1 else 1
    flat = [e.reshape(rows, width) for e in embs]

    max_itemsize = max(jnp.dtype(e.dtype).itemsize for e in embs)
    tile_rows = _pick_tile_rows(rows, width, max_itemsize, n)
    grid = (pl.cdiv(rows, tile_rows),)

    emb_spec = pl.BlockSpec((tile_rows, width), lambda i: (i, 0))
    in_specs = [pl.BlockSpec(memory_space=pltpu.SMEM)] + [emb_spec] * n
    out_specs = tuple(emb_spec for _ in range(n))
    out_shape = tuple(jax.ShapeDtypeStruct((rows, width), e.dtype) for e in embs)

    total_bytes = sum(2 * e.size * jnp.dtype(e.dtype).itemsize for e in embs) + 4
    cost = pl.CostEstimate(
        flops=int(rows * width * 20 + sum(e.size for e in embs)),
        transcendentals=0,
        bytes_accessed=int(total_bytes))

    fn = pl.pallas_call(
        _make_kernel(n, keep, tile_rows, width),
        grid=grid,
        in_specs=in_specs,
        out_specs=out_specs,
        out_shape=out_shape,
        compiler_params=pltpu.CompilerParams(
            # Row tiles are independent -> shard across both TCs on v7x.
            dimension_semantics=("parallel",),
            vmem_limit_bytes=32 * 1024 * 1024,
        ),
        cost_estimate=cost,
    )
    seed_arr = jnp.asarray([seed], dtype=jnp.int32)
    outs = fn(seed_arr, *flat)
    return tuple(o.reshape(shape) for o in outs)


if __name__ == "__main__":
    key = jax.random.PRNGKey(0)
    k1, k2 = jax.random.split(key)

    # Small embedding-like inputs: (batch=2, seq=8, hidden=128)
    B, S, H = 2, 8, 128
    x1 = jax.random.normal(k1, (B, S, H), dtype=jnp.float32)
    x2 = jax.random.normal(k2, (B, S, H), dtype=jnp.float32)

    p = 0.5
    keep = 1.0 - p

    y1, y2 = embeddings_dropout((x1, x2), seed=1234, p=p, training=True)
    y1, y2 = jax.block_until_ready((y1, y2))

    # Every output element is either dropped (exactly 0) or scaled by 1/keep.
    ok1 = jnp.all(jnp.isclose(y1, 0.0) | jnp.isclose(y1, x1 / keep, atol=1e-5))
    ok2 = jnp.all(jnp.isclose(y2, 0.0) | jnp.isclose(y2, x2 / keep, atol=1e-5))
    # SAME mask shared across embeddings (compare drop patterns).
    same_mask = jnp.all((y1 == 0.0) == (y2 == 0.0))
    # Drop fraction is roughly p.
    drop_frac = jnp.mean((y1 == 0.0).astype(jnp.float32))
    frac_ok = (drop_frac > 0.3) & (drop_frac < 0.7)
    # Eval-mode path is identity.
    e1, e2 = embeddings_dropout((x1, x2), seed=1234, p=p, training=False)
    ident = jnp.all(e1 == x1) & jnp.all(e2 == x2)

    assert bool(ok1) and bool(ok2), "output values not in {0, x/keep}"
    assert bool(same_mask), "mask not shared across embeddings"
    assert bool(frac_ok), f"drop fraction {float(drop_frac)} not ~p"
    assert bool(ident), "eval mode must be identity"

    print("KERNEL_OK")
</pallas_src>

<mosaic_0001>
module attributes {stable_mosaic.version = 11 : i64} {
  func.func @kernel(%arg0: i32, %arg1: memref<1xi32, #tpu.memory_space<smem>>, %arg2: memref<16x128xf32, #tpu.memory_space<vmem>>, %arg3: memref<16x128xf32, #tpu.memory_space<vmem>>, %arg4: memref<16x128xf32, #tpu.memory_space<vmem>>, %arg5: memref<16x128xf32, #tpu.memory_space<vmem>>) attributes {dimension_semantics = [#tpu.dimension_semantics<parallel>], iteration_bounds = array<i64: 1>, scalar_prefetch = 0 : i64, scratch_operands = 0 : i64, tpu.core_type = #tpu.core_type<tc>, window_params = [{transform_indices = @transform_0, window_bounds = array<i64: 1>}, {transform_indices = @transform_1, window_bounds = array<i64: 16, 128>}, {transform_indices = @transform_2, window_bounds = array<i64: 16, 128>}, {transform_indices = @transform_3, window_bounds = array<i64: 16, 128>}, {transform_indices = @transform_4, window_bounds = array<i64: 16, 128>}]} {
    %c16_i32 = arith.constant 16 : i32
    %0 = arith.muli %arg0, %c16_i32 : i32
    %1 = tpu.iota {dimensions = array<i32: 0>} : vector<16x128xi32>
    %2 = vector.broadcast %0 : i32 to vector<16x128xi32>
    %3 = arith.addi %1, %2 : vector<16x128xi32>
    %4 = tpu.iota {dimensions = array<i32: 1>} : vector<16x128xi32>
    %c128_i32 = arith.constant 128 : i32
    %5 = vector.broadcast %c128_i32 : i32 to vector<16x128xi32>
    %6 = arith.muli %3, %5 : vector<16x128xi32>
    %7 = arith.addi %6, %4 : vector<16x128xi32>
    %c0 = arith.constant 0 : index
    %8 = memref.load %arg1[%c0] : memref<1xi32, #tpu.memory_space<smem>>
    %c-1640531527_i32 = arith.constant -1640531527 : i32
    %9 = arith.muli %8, %c-1640531527_i32 : i32
    %10 = vector.broadcast %9 : i32 to vector<16x128xi32>
    %11 = arith.xori %7, %10 : vector<16x128xi32>
    %c16_i32_0 = arith.constant 16 : i32
    %12 = vector.broadcast %c16_i32_0 : i32 to vector<16x128xi32>
    %13 = arith.shrsi %11, %12 : vector<16x128xi32>
    %c65535_i32 = arith.constant 65535 : i32
    %14 = vector.broadcast %c65535_i32 : i32 to vector<16x128xi32>
    %15 = arith.andi %13, %14 : vector<16x128xi32>
    %16 = arith.xori %11, %15 : vector<16x128xi32>
    %c2146121005_i32 = arith.constant 2146121005 : i32
    %17 = vector.broadcast %c2146121005_i32 : i32 to vector<16x128xi32>
    %18 = arith.muli %16, %17 : vector<16x128xi32>
    %c15_i32 = arith.constant 15 : i32
    %19 = vector.broadcast %c15_i32 : i32 to vector<16x128xi32>
    %20 = arith.shrsi %18, %19 : vector<16x128xi32>
    %c131071_i32 = arith.constant 131071 : i32
    %21 = vector.broadcast %c131071_i32 : i32 to vector<16x128xi32>
    %22 = arith.andi %20, %21 : vector<16x128xi32>
    %23 = arith.xori %18, %22 : vector<16x128xi32>
    %c-2073254261_i32 = arith.constant -2073254261 : i32
    %24 = vector.broadcast %c-2073254261_i32 : i32 to vector<16x128xi32>
    %25 = arith.muli %23, %24 : vector<16x128xi32>
    %c16_i32_1 = arith.constant 16 : i32
    %26 = vector.broadcast %c16_i32_1 : i32 to vector<16x128xi32>
    %27 = arith.shrsi %25, %26 : vector<16x128xi32>
    %c65535_i32_2 = arith.constant 65535 : i32
    %28 = vector.broadcast %c65535_i32_2 : i32 to vector<16x128xi32>
    %29 = arith.andi %27, %28 : vector<16x128xi32>
    %30 = arith.xori %25, %29 : vector<16x128xi32>
    %c8_i32 = arith.constant 8 : i32
    %31 = vector.broadcast %c8_i32 : i32 to vector<16x128xi32>
    %32 = arith.shrsi %30, %31 : vector<16x128xi32>
    %c16777215_i32 = arith.constant 16777215 : i32
    %33 = vector.broadcast %c16777215_i32 : i32 to vector<16x128xi32>
    %34 = arith.andi %32, %33 : vector<16x128xi32>
    %c8388608_i32 = arith.constant 8388608 : i32
    %35 = vector.broadcast %c8388608_i32 : i32 to vector<16x128xi32>
    %36 = arith.cmpi slt, %34, %35 : vector<16x128xi32>
    %cst = arith.constant 2.000000e+00 : f32
    %cst_3 = arith.constant 0.000000e+00 : f32
    %37 = vector.broadcast %cst : f32 to vector<16x128xf32>
    %38 = vector.broadcast %cst_3 : f32 to vector<16x128xf32>
    %39 = arith.select %36, %37, %38 : vector<16x128xi1>, vector<16x128xf32>
    %c0_4 = arith.constant 0 : index
    %c0_5 = arith.constant 0 : index
    %40 = vector.load %arg2[%c0_4, %c0_5] : memref<16x128xf32, #tpu.memory_space<vmem>>, vector<16x128xf32>
    %41 = arith.mulf %40, %39 : vector<16x128xf32>
    %c0_6 = arith.constant 0 : index
    %c0_7 = arith.constant 0 : index
    %42 = vector.load %arg4[%c0_6, %c0_7] : memref<16x128xf32, #tpu.memory_space<vmem>>, vector<16x128xf32>
    tpu.vector_store %arg4[%c0_6, %c0_7], %41 {strides = array<i32>} : memref<16x128xf32, #tpu.memory_space<vmem>>, vector<16x128xf32>,
    %c0_8 = arith.constant 0 : index
    %c0_9 = arith.constant 0 : index
    %43 = vector.load %arg3[%c0_8, %c0_9] : memref<16x128xf32, #tpu.memory_space<vmem>>, vector<16x128xf32>
    %44 = arith.mulf %43, %39 : vector<16x128xf32>
    %c0_10 = arith.constant 0 : index
    %c0_11 = arith.constant 0 : index
    %45 = vector.load %arg5[%c0_10, %c0_11] : memref<16x128xf32, #tpu.memory_space<vmem>>, vector<16x128xf32>
    tpu.vector_store %arg5[%c0_10, %c0_11], %44 {strides = array<i32>} : memref<16x128xf32, #tpu.memory_space<vmem>>, vector<16x128xf32>,
    return
  }
  func.func @transform_0(%arg0: i32) -> i32 {
    %c0_i32 = arith.constant 0 : i32
    %c0_i32_0 = arith.constant 0 : i32
    return %c0_i32 : i32
  }
  func.func @transform_1(%arg0: i32) -> (i32, i32) {
    %c0_i32 = arith.constant 0 : i32
    %c0_i32_0 = arith.constant 0 : i32
    return %arg0, %c0_i32 : i32, i32
  }
  func.func @transform_2(%arg0: i32) -> (i32, i32) {
    %c0_i32 = arith.constant 0 : i32
    %c0_i32_0 = arith.constant 0 : i32
    return %arg0, %c0_i32 : i32, i32
  }
  func.func @transform_3(%arg0: i32) -> (i32, i32) {
    %c0_i32 = arith.constant 0 : i32
    %c0_i32_0 = arith.constant 0 : i32
    return %arg0, %c0_i32 : i32, i32
  }
  func.func @transform_4(%arg0: i32) -> (i32, i32) {
    %c0_i32 = arith.constant 0 : i32
    %c0_i32_0 = arith.constant 0 : i32
    return %arg0, %c0_i32 : i32, i32
  }
}

</mosaic_0001>

<llo_original>
// kernel: tpu_custom_call.1
$region0: #{tpu_custom_call.1}
  #allocation0 [shape = 'u32[]', space=smem, size = 0x4, offset = 0x4, fixed_abs, tag = 'smem constant byte address 0x4 - core index']
  #allocation1 [shape = 'u32[72,128]{1,0:T(1,128)}', space=vmem, size = 0x9000, scoped, tag = 'internal scratch']
  #allocation2 [shape = 's32[1]{0:T(128)S(6)}', space=smem, size = 0x200, scoped, tag = 'scoped memory for tpu_custom_call.1']
  %s0 = inlined_call_operand.<no memory space> [shape: s32[1], index: 0, kind: input, shape index: {}]
  %s1 = inlined_call_operand.hbm [shape: f32[16,128], index: 1, kind: input, shape index: {}]
  %s2 = inlined_call_operand.hbm [shape: f32[16,128], index: 2, kind: input, shape index: {}]
  %s3 = inlined_call_operand.hbm [shape: f32[16,128], index: 3, kind: output, shape index: {0}]
  %s4 = inlined_call_operand.hbm [shape: f32[16,128], index: 4, kind: output, shape index: {1}]
  %5 = xla_tuple %s3, %s4
  %s6 = sld [smem:[#allocation0]]
  $region38: #{tpu_custom_call.1} parent=0
    _
  %s8 = ssub.s32 1, %s6
  %s9 = scalar_select 0, %s8, %s6
  %10 = sst [smem:[#allocation2]] %s0
  $region1: #{tpu_custom_call.1} parent=0
    #allocation3 [shape = 'u8[8192]{0}', space=vmem, size = 0x2000, scoped, tag = 'input window, operand 1, single buffered']
    #allocation4 [shape = 's32[1]{0}', space=sflag, size = 0x4, scoped, tag = 'scoped memory for tpu_custom_call.1']
    #allocation5 [shape = 's32[1]{0}', space=sflag, size = 0x4, scoped, tag = 'scoped memory for tpu_custom_call.1']
    #allocation6 [shape = 'u8[8192]{0}', space=vmem, size = 0x2000, scoped, tag = 'input window, operand 2, single buffered']
    #allocation7 [shape = 's32[1]{0}', space=sflag, size = 0x4, scoped, tag = 'scoped memory for tpu_custom_call.1']
    #allocation8 [shape = 'u8[8192]{0}', space=vmem, size = 0x2000, scoped, tag = 'output window, operand 0, single buffered']
    #allocation9 [shape = 'u8[8192]{0}', space=vmem, size = 0x2000, scoped, tag = 'output window, operand 1, single buffered']
    #allocation10 [shape = 's32[1]{0}', space=sflag, size = 0x4, scoped, tag = 'scoped memory for tpu_custom_call.1']
    %11 = vsyncpa [#allocation4], 0
    %12 = vsyncpa [#allocation7], 0
    %13 = vsyncpa [#allocation5], 0
    %14 = vsyncpa [#allocation10], 0
    // Predicated region
    $region2: #{tpu_custom_call.1} parent=1 // pred_check
      _
    $region3: #{tpu_custom_call.1} parent=1 // pred_check_branch
      %16 = sbr.rel (0) target = $region5
    $region4: #{tpu_custom_call.1} parent=1 // pred_region
      _
    $region5: #{tpu_custom_call.1} parent=1 // pred_fallthru
      _
    // Predicated region
    $region6: #{tpu_custom_call.1} parent=1 // pred_check
      _
    $region7: #{tpu_custom_call.1} parent=1 // pred_check_branch
      %18 = sbr.rel (0) target = $region9
    $region8: #{tpu_custom_call.1} parent=1 // pred_region
      %20 = vsyncadd [#allocation4], 0
      %s21 = sshll.u32 %s1, 4
      %s22 = int_to_ptr.hbm [resolvable:$true] %s21
      %s23 = sshll.u32 [#allocation3], 4
      %s24 = int_to_ptr.vmem [resolvable:$true] %s23
      %29 = dma.hbm_to_vmem [thread:$0]  %s22, 256, %s24, [#allocation4], 128, 128, 8
    $region9: #{tpu_custom_call.1} parent=1 // pred_fallthru
      _
    // Predicated region
    $region10: #{tpu_custom_call.1} parent=1 // pred_check
      _
    $region11: #{tpu_custom_call.1} parent=1 // pred_check_branch
      %31 = sbr.rel (0) target = $region13
    $region12: #{tpu_custom_call.1} parent=1 // pred_region
      %33 = vsyncadd [#allocation7], 0
      %s34 = sshll.u32 %s2, 4
      %s35 = int_to_ptr.hbm [resolvable:$true] %s34
      %s36 = sshll.u32 [#allocation6], 4
      %s37 = int_to_ptr.vmem [resolvable:$true] %s36
      %42 = dma.hbm_to_vmem [thread:$0]  %s35, 256, %s37, [#allocation7], 128, 128, 8
    $region13: #{tpu_custom_call.1} parent=1 // pred_fallthru
      _
    // Predicated region
    $region14: #{tpu_custom_call.1} parent=1 // pred_check
      _
    $region15: #{tpu_custom_call.1} parent=1 // pred_check_branch
      %44 = sbr.rel (0) target = $region17
    $region16: #{tpu_custom_call.1} parent=1 // pred_region
      %46 = dma.done [#allocation4], 256
    $region17: #{tpu_custom_call.1} parent=1 // pred_fallthru
      _
    // Predicated region
    $region18: #{tpu_custom_call.1} parent=1 // pred_check
      _
    $region19: #{tpu_custom_call.1} parent=1 // pred_check_branch
      %48 = sbr.rel (0) target = $region21
    $region20: #{tpu_custom_call.1} parent=1 // pred_region
      %50 = dma.done [#allocation7], 256
    $region21: #{tpu_custom_call.1} parent=1 // pred_fallthru
      _
    %s51 = smul.u32 0, 16
    %v52 = vlaneseq
    %v53 = vshrl.u32 %v52, 7
    %v54 = vadd.s32 %v53, 8
    %v55 = vstv %s51
    %v56 = vadd.s32 %v53, %v55
    %v57 = vadd.s32 %v54, %v55
    %v58 = vlaneseq
    %v59 = vand.u32 %v58, 127
    %v60 = vmul.u32 %v56, 128
    %v61 = vmul.u32 %v57, 128
    %v62 = vadd.s32 %v60, %v59
    %v63 = vadd.s32 %v61, %v59
    %s64 = sld [smem:[#allocation2]]
    %s65 = smul.u32 %s64, 2654435769
    %v66 = vstv %s65
    %v67 = vxor.u32 %v62, %v66
    %v68 = vxor.u32 %v63, %v66
    %v69 = vshra.s32 %v67, 16
    %v70 = vshra.s32 %v68, 16
    %v71 = vand.u32 %v69, 65535
    %v72 = vand.u32 %v70, 65535
    %v73 = vxor.u32 %v67, %v71
    %v74 = vxor.u32 %v68, %v72
    %v75 = vmul.u32 %v73, 2146121005
    %v76 = vmul.u32 %v74, 2146121005
    %v77 = vshra.s32 %v75, 15
    %v78 = vshra.s32 %v76, 15
    %v79 = vand.u32 %v77, 131071
    %v80 = vand.u32 %v78, 131071
    %v81 = vxor.u32 %v75, %v79
    %v82 = vxor.u32 %v76, %v80
    %v83 = vmul.u32 %v81, 2221713035
    %v84 = vmul.u32 %v82, 2221713035
    %v85 = vshra.s32 %v83, 16
    %v86 = vshra.s32 %v84, 16
    %v87 = vand.u32 %v85, 65535
    %v88 = vand.u32 %v86, 65535
    %v89 = vxor.u32 %v83, %v87
    %v90 = vxor.u32 %v84, %v88
    %v91 = vshra.s32 %v89, 8
    %v92 = vshra.s32 %v90, 8
    %v93 = vand.u32 %v91, 16777215
    %v94 = vand.u32 %v92, 16777215
    %vm95 = vcmp.lt.s32.totalorder %v93, 8388608
    %vm96 = vcmp.lt.s32.totalorder %v94, 8388608
    %v97 = vsel %vm95, 2.0, 0.0
    %v98 = vsel %vm96, 2.0, 0.0
    %v99 = vld [vmem:[#allocation3] sm:$0xff]
    %v100 = vld [vmem:[#allocation3 + $0x8] sm:$0xff]
    %v101 = vmul.f32 %v99, %v97
    %v102 = vmul.f32 %v100, %v98
    %103 = vst [vmem:[#allocation8] sm:$0xff] %v101
    %104 = vst [vmem:[#allocation8 + $0x8] sm:$0xff] %v102
    %v105 = vld [vmem:[#allocation6] sm:$0xff]
    %v106 = vld [vmem:[#allocation6 + $0x8] sm:$0xff]
    %v107 = vmul.f32 %v105, %v97
    %v108 = vmul.f32 %v106, %v98
    %109 = vst [vmem:[#allocation9] sm:$0xff] %v107
    %110 = vst [vmem:[#allocation9 + $0x8] sm:$0xff] %v108
    // Predicated region
    $region22: #{tpu_custom_call.1} parent=1 // pred_check
      _
    $region23: #{tpu_custom_call.1} parent=1 // pred_check_branch
      %112 = sbr.rel (0) target = $region25
    $region24: #{tpu_custom_call.1} parent=1 // pred_region
      %114 = vsyncadd [#allocation5], 0
      %s115 = sshll.u32 [#allocation8], 4
      %s116 = int_to_ptr.vmem [resolvable:$true] %s115
      %s117 = sshll.u32 %s3, 4
      %s118 = int_to_ptr.hbm [resolvable:$true] %s117
      %123 = dma.vmem_to_hbm [thread:$0]  %s116, 256, %s118, [#allocation5], 128, 128, 8
    $region25: #{tpu_custom_call.1} parent=1 // pred_fallthru
      _
    // Predicated region
    $region26: #{tpu_custom_call.1} parent=1 // pred_check
      _
    $region27: #{tpu_custom_call.1} parent=1 // pred_check_branch
      %125 = sbr.rel (0) target = $region29
    $region28: #{tpu_custom_call.1} parent=1 // pred_region
      %127 = vsyncadd [#allocation10], 0
      %s128 = sshll.u32 [#allocation9], 4
      %s129 = int_to_ptr.vmem [resolvable:$true] %s128
      %s130 = sshll.u32 %s4, 4
      %s131 = int_to_ptr.hbm [resolvable:$true] %s130
      %136 = dma.vmem_to_hbm [thread:$0]  %s129, 256, %s131, [#allocation10], 128, 128, 8
    $region29: #{tpu_custom_call.1} parent=1 // pred_fallthru
      _
    // Predicated region
    $region30: #{tpu_custom_call.1} parent=1 // pred_check
      _
    $region31: #{tpu_custom_call.1} parent=1 // pred_check_branch
      %138 = sbr.rel (0) target = $region33
    $region32: #{tpu_custom_call.1} parent=1 // pred_region
      %140 = dma.done [#allocation5], 256
    $region33: #{tpu_custom_call.1} parent=1 // pred_fallthru
      _
    // Predicated region
    $region34: #{tpu_custom_call.1} parent=1 // pred_check
      _
    $region35: #{tpu_custom_call.1} parent=1 // pred_check_branch
      %142 = sbr.rel (0) target = $region37
    $region36: #{tpu_custom_call.1} parent=1 // pred_region
      %144 = dma.done [#allocation10], 256
    $region37: #{tpu_custom_call.1} parent=1 // pred_fallthru
      _
    %145 = vsyncpa [#allocation4], 1
    %146 = vsyncpa [#allocation7], 1
    %147 = vsyncpa [#allocation5], 1
    %148 = vsyncpa [#allocation10], 1

</llo_original>
